<compile_context>
chip_gen: v6e
topology: v6e:2x2x1
jax: 0.10.0
libtpu: 0.0.40
codegen_flags: <defaults>
</compile_context>

<pallas_src>
import functools

import jax
import jax.numpy as jnp
from jax.experimental import pallas as pl
from jax.experimental.pallas import tpu as pltpu


def _related_embeddings_kernel(ids_ref, table_ref, out_ref, *, tb, seq_len):
    # ids_ref:   SMEM (B_pad, S) int32   (scalar-prefetched token ids)
    # table_ref: VMEM (V, D)             whole embedding table, resident
    # out_ref:   VMEM (TB, D)            output tile for this batch tile
    b0 = pl.program_id(0) * tb
    d = out_ref.shape[-1]
    inv_s = 1.0 / seq_len

    rows = []
    for r in range(tb):                       # static unroll: TB = 8 rows
        acc = jnp.zeros((1, d), jnp.float32)
        for s in range(seq_len):              # static unroll over the sequence
            idx = ids_ref[b0 + r, s]          # scalar read from SMEM
            # dynamic single-row slice of the VMEM-resident table
            acc = acc + table_ref[pl.ds(idx, 1), :].astype(jnp.float32)
        rows.append(acc)

    # one dense (TB, D) store, f32 accumulation, scale by 1/S (the mean)
    out_ref[...] = (jnp.concatenate(rows, axis=0) * inv_s).astype(out_ref.dtype)


def related_embeddings(input_ids: jax.Array, table: jax.Array, *, tb: int = 8) -> jax.Array:
    """input_ids: (B, S) int32, table: (V, D) float -> (B, D) float (mean over S)."""
    B, S = input_ids.shape
    V, D = table.shape

    # Pad the batch up to a multiple of the tile size (index 0 is a valid row;
    # padded outputs are sliced off below).
    b_pad = ((B + tb - 1) // tb) * tb
    ids = input_ids.astype(jnp.int32)
    if b_pad != B:
        ids = jnp.pad(ids, ((0, b_pad - B), (0, 0)))

    # VMEM budget: table (double-buffered by the pipeline) + tiles + headroom,
    # capped at v7x's 64 MiB physical VMEM.
    table_bytes = V * D * table.dtype.itemsize
    vmem_limit = int(min(64 * 1024 * 1024,
                         max(32 * 1024 * 1024, 2 * table_bytes + (4 << 20))))

    grid_spec = pltpu.PrefetchScalarGridSpec(
        num_scalar_prefetch=1,
        grid=(b_pad // tb,),
        in_specs=[
            # Whole table, constant block index -> fetched once, stays in VMEM.
            pl.BlockSpec((V, D), lambda bt, ids: (0, 0)),
        ],
        out_specs=pl.BlockSpec((tb, D), lambda bt, ids: (bt, 0)),
        scratch_shapes=[],
    )

    out = pl.pallas_call(
        functools.partial(_related_embeddings_kernel, tb=tb, seq_len=S),
        out_shape=jax.ShapeDtypeStruct((b_pad, D), table.dtype),
        grid_spec=grid_spec,
        compiler_params=pltpu.CompilerParams(
            dimension_semantics=("parallel",),
            vmem_limit_bytes=vmem_limit,
        ),
    )(ids, table)

    return out[:B]


if __name__ == "__main__":
    # Deterministic synthetic "related_embeddings" table (stands in for the
    # pretrained tensor passed to nn.Embedding.from_pretrained).
    key = jax.random.PRNGKey(0)
    k_tab, k_ids = jax.random.split(key)

    V, D = 64, 128          # vocab size, relatedness embedding dim
    B, S = 2, 8             # batch, sequence length

    table = jax.random.normal(k_tab, (V, D), dtype=jnp.float32)
    input_ids = jax.random.randint(k_ids, (B, S), 0, V, dtype=jnp.int32)

    out = related_embeddings(input_ids, table)
    out = jax.block_until_ready(out)

    # Pure-JAX reference: mean of embedding lookups over the sequence axis.
    ref = jnp.mean(table[input_ids], axis=1)
    assert out.shape == (B, D)
    assert jnp.allclose(out, ref, atol=1e-5, rtol=1e-5)

    print("KERNEL_OK")
</pallas_src>

<mosaic_0001>
module attributes {stable_mosaic.version = 11 : i64} {
  func.func @_related_embeddings_kernel(%arg0: i32, %arg1: memref<8x8xi32, #tpu.memory_space<smem>>, %arg2: memref<64x128xf32, #tpu.memory_space<vmem>>, %arg3: memref<8x128xf32, #tpu.memory_space<vmem>>) attributes {dimension_semantics = [#tpu.dimension_semantics<parallel>], iteration_bounds = array<i64: 1>, scalar_prefetch = 1 : i64, scratch_operands = 0 : i64, tpu.core_type = #tpu.core_type<tc>, window_params = [{pipeline_mode = #tpu.pipeline_mode<synchronous>, transform_indices = @transform_0, window_bounds = array<i64: 64, 128>}, {transform_indices = @transform_1, window_bounds = array<i64: 8, 128>}]} {
    %c8_i32 = arith.constant 8 : i32
    %0 = arith.muli %arg0, %c8_i32 : i32
    %cst = arith.constant 0.000000e+00 : f32
    %1 = vector.broadcast %cst : f32 to vector<1x128xf32>
    %c0_i32 = arith.constant 0 : i32
    %2 = arith.addi %0, %c0_i32 : i32
    %3 = arith.index_cast %2 : i32 to index
    %c0 = arith.constant 0 : index
    %4 = memref.load %arg1[%3, %c0] : memref<8x8xi32, #tpu.memory_space<smem>>
    %5 = arith.index_cast %4 : i32 to index
    %c0_0 = arith.constant 0 : index
    %6 = vector.load %arg2[%5, %c0_0] : memref<64x128xf32, #tpu.memory_space<vmem>>, vector<1x128xf32>
    %7 = arith.addf %1, %6 : vector<1x128xf32>
    %c0_i32_1 = arith.constant 0 : i32
    %8 = arith.addi %0, %c0_i32_1 : i32
    %9 = arith.index_cast %8 : i32 to index
    %c1 = arith.constant 1 : index
    %10 = memref.load %arg1[%9, %c1] : memref<8x8xi32, #tpu.memory_space<smem>>
    %11 = arith.index_cast %10 : i32 to index
    %c0_2 = arith.constant 0 : index
    %12 = vector.load %arg2[%11, %c0_2] : memref<64x128xf32, #tpu.memory_space<vmem>>, vector<1x128xf32>
    %13 = arith.addf %7, %12 : vector<1x128xf32>
    %c0_i32_3 = arith.constant 0 : i32
    %14 = arith.addi %0, %c0_i32_3 : i32
    %15 = arith.index_cast %14 : i32 to index
    %c2 = arith.constant 2 : index
    %16 = memref.load %arg1[%15, %c2] : memref<8x8xi32, #tpu.memory_space<smem>>
    %17 = arith.index_cast %16 : i32 to index
    %c0_4 = arith.constant 0 : index
    %18 = vector.load %arg2[%17, %c0_4] : memref<64x128xf32, #tpu.memory_space<vmem>>, vector<1x128xf32>
    %19 = arith.addf %13, %18 : vector<1x128xf32>
    %c0_i32_5 = arith.constant 0 : i32
    %20 = arith.addi %0, %c0_i32_5 : i32
    %21 = arith.index_cast %20 : i32 to index
    %c3 = arith.constant 3 : index
    %22 = memref.load %arg1[%21, %c3] : memref<8x8xi32, #tpu.memory_space<smem>>
    %23 = arith.index_cast %22 : i32 to index
    %c0_6 = arith.constant 0 : index
    %24 = vector.load %arg2[%23, %c0_6] : memref<64x128xf32, #tpu.memory_space<vmem>>, vector<1x128xf32>
    %25 = arith.addf %19, %24 : vector<1x128xf32>
    %c0_i32_7 = arith.constant 0 : i32
    %26 = arith.addi %0, %c0_i32_7 : i32
    %27 = arith.index_cast %26 : i32 to index
    %c4 = arith.constant 4 : index
    %28 = memref.load %arg1[%27, %c4] : memref<8x8xi32, #tpu.memory_space<smem>>
    %29 = arith.index_cast %28 : i32 to index
    %c0_8 = arith.constant 0 : index
    %30 = vector.load %arg2[%29, %c0_8] : memref<64x128xf32, #tpu.memory_space<vmem>>, vector<1x128xf32>
    %31 = arith.addf %25, %30 : vector<1x128xf32>
    %c0_i32_9 = arith.constant 0 : i32
    %32 = arith.addi %0, %c0_i32_9 : i32
    %33 = arith.index_cast %32 : i32 to index
    %c5 = arith.constant 5 : index
    %34 = memref.load %arg1[%33, %c5] : memref<8x8xi32, #tpu.memory_space<smem>>
    %35 = arith.index_cast %34 : i32 to index
    %c0_10 = arith.constant 0 : index
    %36 = vector.load %arg2[%35, %c0_10] : memref<64x128xf32, #tpu.memory_space<vmem>>, vector<1x128xf32>
    %37 = arith.addf %31, %36 : vector<1x128xf32>
    %c0_i32_11 = arith.constant 0 : i32
    %38 = arith.addi %0, %c0_i32_11 : i32
    %39 = arith.index_cast %38 : i32 to index
    %c6 = arith.constant 6 : index
    %40 = memref.load %arg1[%39, %c6] : memref<8x8xi32, #tpu.memory_space<smem>>
    %41 = arith.index_cast %40 : i32 to index
    %c0_12 = arith.constant 0 : index
    %42 = vector.load %arg2[%41, %c0_12] : memref<64x128xf32, #tpu.memory_space<vmem>>, vector<1x128xf32>
    %43 = arith.addf %37, %42 : vector<1x128xf32>
    %c0_i32_13 = arith.constant 0 : i32
    %44 = arith.addi %0, %c0_i32_13 : i32
    %45 = arith.index_cast %44 : i32 to index
    %c7 = arith.constant 7 : index
    %46 = memref.load %arg1[%45, %c7] : memref<8x8xi32, #tpu.memory_space<smem>>
    %47 = arith.index_cast %46 : i32 to index
    %c0_14 = arith.constant 0 : index
    %48 = vector.load %arg2[%47, %c0_14] : memref<64x128xf32, #tpu.memory_space<vmem>>, vector<1x128xf32>
    %49 = arith.addf %43, %48 : vector<1x128xf32>
    %cst_15 = arith.constant 0.000000e+00 : f32
    %50 = vector.broadcast %cst_15 : f32 to vector<1x128xf32>
    %c1_i32 = arith.constant 1 : i32
    %51 = arith.addi %0, %c1_i32 : i32
    %52 = arith.index_cast %51 : i32 to index
    %c0_16 = arith.constant 0 : index
    %53 = memref.load %arg1[%52, %c0_16] : memref<8x8xi32, #tpu.memory_space<smem>>
    %54 = arith.index_cast %53 : i32 to index
    %c0_17 = arith.constant 0 : index
    %55 = vector.load %arg2[%54, %c0_17] : memref<64x128xf32, #tpu.memory_space<vmem>>, vector<1x128xf32>
    %56 = arith.addf %50, %55 : vector<1x128xf32>
    %c1_i32_18 = arith.constant 1 : i32
    %57 = arith.addi %0, %c1_i32_18 : i32
    %58 = arith.index_cast %57 : i32 to index
    %c1_19 = arith.constant 1 : index
    %59 = memref.load %arg1[%58, %c1_19] : memref<8x8xi32, #tpu.memory_space<smem>>
    %60 = arith.index_cast %59 : i32 to index
    %c0_20 = arith.constant 0 : index
    %61 = vector.load %arg2[%60, %c0_20] : memref<64x128xf32, #tpu.memory_space<vmem>>, vector<1x128xf32>
    %62 = arith.addf %56, %61 : vector<1x128xf32>
    %c1_i32_21 = arith.constant 1 : i32
    %63 = arith.addi %0, %c1_i32_21 : i32
    %64 = arith.index_cast %63 : i32 to index
    %c2_22 = arith.constant 2 : index
    %65 = memref.load %arg1[%64, %c2_22] : memref<8x8xi32, #tpu.memory_space<smem>>
    %66 = arith.index_cast %65 : i32 to index
    %c0_23 = arith.constant 0 : index
    %67 = vector.load %arg2[%66, %c0_23] : memref<64x128xf32, #tpu.memory_space<vmem>>, vector<1x128xf32>
    %68 = arith.addf %62, %67 : vector<1x128xf32>
    %c1_i32_24 = arith.constant 1 : i32
    %69 = arith.addi %0, %c1_i32_24 : i32
    %70 = arith.index_cast %69 : i32 to index
    %c3_25 = arith.constant 3 : index
    %71 = memref.load %arg1[%70, %c3_25] : memref<8x8xi32, #tpu.memory_space<smem>>
    %72 = arith.index_cast %71 : i32 to index
    %c0_26 = arith.constant 0 : index
    %73 = vector.load %arg2[%72, %c0_26] : memref<64x128xf32, #tpu.memory_space<vmem>>, vector<1x128xf32>
    %74 = arith.addf %68, %73 : vector<1x128xf32>
    %c1_i32_27 = arith.constant 1 : i32
    %75 = arith.addi %0, %c1_i32_27 : i32
    %76 = arith.index_cast %75 : i32 to index
    %c4_28 = arith.constant 4 : index
    %77 = memref.load %arg1[%76, %c4_28] : memref<8x8xi32, #tpu.memory_space<smem>>
    %78 = arith.index_cast %77 : i32 to index
    %c0_29 = arith.constant 0 : index
    %79 = vector.load %arg2[%78, %c0_29] : memref<64x128xf32, #tpu.memory_space<vmem>>, vector<1x128xf32>
    %80 = arith.addf %74, %79 : vector<1x128xf32>
    %c1_i32_30 = arith.constant 1 : i32
    %81 = arith.addi %0, %c1_i32_30 : i32
    %82 = arith.index_cast %81 : i32 to index
    %c5_31 = arith.constant 5 : index
    %83 = memref.load %arg1[%82, %c5_31] : memref<8x8xi32, #tpu.memory_space<smem>>
    %84 = arith.index_cast %83 : i32 to index
    %c0_32 = arith.constant 0 : index
    %85 = vector.load %arg2[%84, %c0_32] : memref<64x128xf32, #tpu.memory_space<vmem>>, vector<1x128xf32>
    %86 = arith.addf %80, %85 : vector<1x128xf32>
    %c1_i32_33 = arith.constant 1 : i32
    %87 = arith.addi %0, %c1_i32_33 : i32
    %88 = arith.index_cast %87 : i32 to index
    %c6_34 = arith.constant 6 : index
    %89 = memref.load %arg1[%88, %c6_34] : memref<8x8xi32, #tpu.memory_space<smem>>
    %90 = arith.index_cast %89 : i32 to index
    %c0_35 = arith.constant 0 : index
    %91 = vector.load %arg2[%90, %c0_35] : memref<64x128xf32, #tpu.memory_space<vmem>>, vector<1x128xf32>
    %92 = arith.addf %86, %91 : vector<1x128xf32>
    %c1_i32_36 = arith.constant 1 : i32
    %93 = arith.addi %0, %c1_i32_36 : i32
    %94 = arith.index_cast %93 : i32 to index
    %c7_37 = arith.constant 7 : index
    %95 = memref.load %arg1[%94, %c7_37] : memref<8x8xi32, #tpu.memory_space<smem>>
    %96 = arith.index_cast %95 : i32 to index
    %c0_38 = arith.constant 0 : index
    %97 = vector.load %arg2[%96, %c0_38] : memref<64x128xf32, #tpu.memory_space<vmem>>, vector<1x128xf32>
    %98 = arith.addf %92, %97 : vector<1x128xf32>
    %cst_39 = arith.constant 0.000000e+00 : f32
    %99 = vector.broadcast %cst_39 : f32 to vector<1x128xf32>
    %c2_i32 = arith.constant 2 : i32
    %100 = arith.addi %0, %c2_i32 : i32
    %101 = arith.index_cast %100 : i32 to index
    %c0_40 = arith.constant 0 : index
    %102 = memref.load %arg1[%101, %c0_40] : memref<8x8xi32, #tpu.memory_space<smem>>
    %103 = arith.index_cast %102 : i32 to index
    %c0_41 = arith.constant 0 : index
    %104 = vector.load %arg2[%103, %c0_41] : memref<64x128xf32, #tpu.memory_space<vmem>>, vector<1x128xf32>
    %105 = arith.addf %99, %104 : vector<1x128xf32>
    %c2_i32_42 = arith.constant 2 : i32
    %106 = arith.addi %0, %c2_i32_42 : i32
    %107 = arith.index_cast %106 : i32 to index
    %c1_43 = arith.constant 1 : index
    %108 = memref.load %arg1[%107, %c1_43] : memref<8x8xi32, #tpu.memory_space<smem>>
    %109 = arith.index_cast %108 : i32 to index
    %c0_44 = arith.constant 0 : index
    %110 = vector.load %arg2[%109, %c0_44] : memref<64x128xf32, #tpu.memory_space<vmem>>, vector<1x128xf32>
    %111 = arith.addf %105, %110 : vector<1x128xf32>
    %c2_i32_45 = arith.constant 2 : i32
    %112 = arith.addi %0, %c2_i32_45 : i32
    %113 = arith.index_cast %112 : i32 to index
    %c2_46 = arith.constant 2 : index
    %114 = memref.load %arg1[%113, %c2_46] : memref<8x8xi32, #tpu.memory_space<smem>>
    %115 = arith.index_cast %114 : i32 to index
    %c0_47 = arith.constant 0 : index
    %116 = vector.load %arg2[%115, %c0_47] : memref<64x128xf32, #tpu.memory_space<vmem>>, vector<1x128xf32>
    %117 = arith.addf %111, %116 : vector<1x128xf32>
    %c2_i32_48 = arith.constant 2 : i32
    %118 = arith.addi %0, %c2_i32_48 : i32
    %119 = arith.index_cast %118 : i32 to index
    %c3_49 = arith.constant 3 : index
    %120 = memref.load %arg1[%119, %c3_49] : memref<8x8xi32, #tpu.memory_space<smem>>
    %121 = arith.index_cast %120 : i32 to index
    %c0_50 = arith.constant 0 : index
    %122 = vector.load %arg2[%121, %c0_50] : memref<64x128xf32, #tpu.memory_space<vmem>>, vector<1x128xf32>
    %123 = arith.addf %117, %122 : vector<1x128xf32>
    %c2_i32_51 = arith.constant 2 : i32
    %124 = arith.addi %0, %c2_i32_51 : i32
    %125 = arith.index_cast %124 : i32 to index
    %c4_52 = arith.constant 4 : index
    %126 = memref.load %arg1[%125, %c4_52] : memref<8x8xi32, #tpu.memory_space<smem>>
    %127 = arith.index_cast %126 : i32 to index
    %c0_53 = arith.constant 0 : index
    %128 = vector.load %arg2[%127, %c0_53] : memref<64x128xf32, #tpu.memory_space<vmem>>, vector<1x128xf32>
    %129 = arith.addf %123, %128 : vector<1x128xf32>
    %c2_i32_54 = arith.constant 2 : i32
    %130 = arith.addi %0, %c2_i32_54 : i32
    %131 = arith.index_cast %130 : i32 to index
    %c5_55 = arith.constant 5 : index
    %132 = memref.load %arg1[%131, %c5_55] : memref<8x8xi32, #tpu.memory_space<smem>>
    %133 = arith.index_cast %132 : i32 to index
    %c0_56 = arith.constant 0 : index
    %134 = vector.load %arg2[%133, %c0_56] : memref<64x128xf32, #tpu.memory_space<vmem>>, vector<1x128xf32>
    %135 = arith.addf %129, %134 : vector<1x128xf32>
    %c2_i32_57 = arith.constant 2 : i32
    %136 = arith.addi %0, %c2_i32_57 : i32
    %137 = arith.index_cast %136 : i32 to index
    %c6_58 = arith.constant 6 : index
    %138 = memref.load %arg1[%137, %c6_58] : memref<8x8xi32, #tpu.memory_space<smem>>
    %139 = arith.index_cast %138 : i32 to index
    %c0_59 = arith.constant 0 : index
    %140 = vector.load %arg2[%139, %c0_59] : memref<64x128xf32, #tpu.memory_space<vmem>>, vector<1x128xf32>
    %141 = arith.addf %135, %140 : vector<1x128xf32>
    %c2_i32_60 = arith.constant 2 : i32
    %142 = arith.addi %0, %c2_i32_60 : i32
    %143 = arith.index_cast %142 : i32 to index
    %c7_61 = arith.constant 7 : index
    %144 = memref.load %arg1[%143, %c7_61] : memref<8x8xi32, #tpu.memory_space<smem>>
    %145 = arith.index_cast %144 : i32 to index
    %c0_62 = arith.constant 0 : index
    %146 = vector.load %arg2[%145, %c0_62] : memref<64x128xf32, #tpu.memory_space<vmem>>, vector<1x128xf32>
    %147 = arith.addf %141, %146 : vector<1x128xf32>
    %cst_63 = arith.constant 0.000000e+00 : f32
    %148 = vector.broadcast %cst_63 : f32 to vector<1x128xf32>
    %c3_i32 = arith.constant 3 : i32
    %149 = arith.addi %0, %c3_i32 : i32
    %150 = arith.index_cast %149 : i32 to index
    %c0_64 = arith.constant 0 : index
    %151 = memref.load %arg1[%150, %c0_64] : memref<8x8xi32, #tpu.memory_space<smem>>
    %152 = arith.index_cast %151 : i32 to index
    %c0_65 = arith.constant 0 : index
    %153 = vector.load %arg2[%152, %c0_65] : memref<64x128xf32, #tpu.memory_space<vmem>>, vector<1x128xf32>
    %154 = arith.addf %148, %153 : vector<1x128xf32>
    %c3_i32_66 = arith.constant 3 : i32
    %155 = arith.addi %0, %c3_i32_66 : i32
    %156 = arith.index_cast %155 : i32 to index
    %c1_67 = arith.constant 1 : index
    %157 = memref.load %arg1[%156, %c1_67] : memref<8x8xi32, #tpu.memory_space<smem>>
    %158 = arith.index_cast %157 : i32 to index
    %c0_68 = arith.constant 0 : index
    %159 = vector.load %arg2[%158, %c0_68] : memref<64x128xf32, #tpu.memory_space<vmem>>, vector<1x128xf32>
    %160 = arith.addf %154, %159 : vector<1x128xf32>
    %c3_i32_69 = arith.constant 3 : i32
    %161 = arith.addi %0, %c3_i32_69 : i32
    %162 = arith.index_cast %161 : i32 to index
    %c2_70 = arith.constant 2 : index
    %163 = memref.load %arg1[%162, %c2_70] : memref<8x8xi32, #tpu.memory_space<smem>>
    %164 = arith.index_cast %163 : i32 to index
    %c0_71 = arith.constant 0 : index
    %165 = vector.load %arg2[%164, %c0_71] : memref<64x128xf32, #tpu.memory_space<vmem>>, vector<1x128xf32>
    %166 = arith.addf %160, %165 : vector<1x128xf32>
    %c3_i32_72 = arith.constant 3 : i32
    %167 = arith.addi %0, %c3_i32_72 : i32
    %168 = arith.index_cast %167 : i32 to index
    %c3_73 = arith.constant 3 : index
    %169 = memref.load %arg1[%168, %c3_73] : memref<8x8xi32, #tpu.memory_space<smem>>
    %170 = arith.index_cast %169 : i32 to index
    %c0_74 = arith.constant 0 : index
    %171 = vector.load %arg2[%170, %c0_74] : memref<64x128xf32, #tpu.memory_space<vmem>>, vector<1x128xf32>
    %172 = arith.addf %166, %171 : vector<1x128xf32>
    %c3_i32_75 = arith.constant 3 : i32
    %173 = arith.addi %0, %c3_i32_75 : i32
    %174 = arith.index_cast %173 : i32 to index
    %c4_76 = arith.constant 4 : index
    %175 = memref.load %arg1[%174, %c4_76] : memref<8x8xi32, #tpu.memory_space<smem>>
    %176 = arith.index_cast %175 : i32 to index
    %c0_77 = arith.constant 0 : index
    %177 = vector.load %arg2[%176, %c0_77] : memref<64x128xf32, #tpu.memory_space<vmem>>, vector<1x128xf32>
    %178 = arith.addf %172, %177 : vector<1x128xf32>
    %c3_i32_78 = arith.constant 3 : i32
    %179 = arith.addi %0, %c3_i32_78 : i32
    %180 = arith.index_cast %179 : i32 to index
    %c5_79 = arith.constant 5 : index
    %181 = memref.load %arg1[%180, %c5_79] : memref<8x8xi32, #tpu.memory_space<smem>>
    %182 = arith.index_cast %181 : i32 to index
    %c0_80 = arith.constant 0 : index
    %183 = vector.load %arg2[%182, %c0_80] : memref<64x128xf32, #tpu.memory_space<vmem>>, vector<1x128xf32>
    %184 = arith.addf %178, %183 : vector<1x128xf32>
    %c3_i32_81 = arith.constant 3 : i32
    %185 = arith.addi %0, %c3_i32_81 : i32
    %186 = arith.index_cast %185 : i32 to index
    %c6_82 = arith.constant 6 : index
    %187 = memref.load %arg1[%186, %c6_82] : memref<8x8xi32, #tpu.memory_space<smem>>
    %188 = arith.index_cast %187 : i32 to index
    %c0_83 = arith.constant 0 : index
    %189 = vector.load %arg2[%188, %c0_83] : memref<64x128xf32, #tpu.memory_space<vmem>>, vector<1x128xf32>
    %190 = arith.addf %184, %189 : vector<1x128xf32>
    %c3_i32_84 = arith.constant 3 : i32
    %191 = arith.addi %0, %c3_i32_84 : i32
    %192 = arith.index_cast %191 : i32 to index
    %c7_85 = arith.constant 7 : index
    %193 = memref.load %arg1[%192, %c7_85] : memref<8x8xi32, #tpu.memory_space<smem>>
    %194 = arith.index_cast %193 : i32 to index
    %c0_86 = arith.constant 0 : index
    %195 = vector.load %arg2[%194, %c0_86] : memref<64x128xf32, #tpu.memory_space<vmem>>, vector<1x128xf32>
    %196 = arith.addf %190, %195 : vector<1x128xf32>
    %cst_87 = arith.constant 0.000000e+00 : f32
    %197 = vector.broadcast %cst_87 : f32 to vector<1x128xf32>
    %c4_i32 = arith.constant 4 : i32
    %198 = arith.addi %0, %c4_i32 : i32
    %199 = arith.index_cast %198 : i32 to index
    %c0_88 = arith.constant 0 : index
    %200 = memref.load %arg1[%199, %c0_88] : memref<8x8xi32, #tpu.memory_space<smem>>
    %201 = arith.index_cast %200 : i32 to index
    %c0_89 = arith.constant 0 : index
    %202 = vector.load %arg2[%201, %c0_89] : memref<64x128xf32, #tpu.memory_space<vmem>>, vector<1x128xf32>
    %203 = arith.addf %197, %202 : vector<1x128xf32>
    %c4_i32_90 = arith.constant 4 : i32
    %204 = arith.addi %0, %c4_i32_90 : i32
    %205 = arith.index_cast %204 : i32 to index
    %c1_91 = arith.constant 1 : index
    %206 = memref.load %arg1[%205, %c1_91] : memref<8x8xi32, #tpu.memory_space<smem>>
    %207 = arith.index_cast %206 : i32 to index
    %c0_92 = arith.constant 0 : index
    %208 = vector.load %arg2[%207, %c0_92] : memref<64x128xf32, #tpu.memory_space<vmem>>, vector<1x128xf32>
    %209 = arith.addf %203, %208 : vector<1x128xf32>
    %c4_i32_93 = arith.constant 4 : i32
    %210 = arith.addi %0, %c4_i32_93 : i32
    %211 = arith.index_cast %210 : i32 to index
    %c2_94 = arith.constant 2 : index
    %212 = memref.load %arg1[%211, %c2_94] : memref<8x8xi32, #tpu.memory_space<smem>>
    %213 = arith.index_cast %212 : i32 to index
    %c0_95 = arith.constant 0 : index
    %214 = vector.load %arg2[%213, %c0_95] : memref<64x128xf32, #tpu.memory_space<vmem>>, vector<1x128xf32>
    %215 = arith.addf %209, %214 : vector<1x128xf32>
    %c4_i32_96 = arith.constant 4 : i32
    %216 = arith.addi %0, %c4_i32_96 : i32
    %217 = arith.index_cast %216 : i32 to index
    %c3_97 = arith.constant 3 : index
    %218 = memref.load %arg1[%217, %c3_97] : memref<8x8xi32, #tpu.memory_space<smem>>
    %219 = arith.index_cast %218 : i32 to index
    %c0_98 = arith.constant 0 : index
    %220 = vector.load %arg2[%219, %c0_98] : memref<64x128xf32, #tpu.memory_space<vmem>>, vector<1x128xf32>
    %221 = arith.addf %215, %220 : vector<1x128xf32>
    %c4_i32_99 = arith.constant 4 : i32
    %222 = arith.addi %0, %c4_i32_99 : i32
    %223 = arith.index_cast %222 : i32 to index
    %c4_100 = arith.constant 4 : index
    %224 = memref.load %arg1[%223, %c4_100] : memref<8x8xi32, #tpu.memory_space<smem>>
    %225 = arith.index_cast %224 : i32 to index
    %c0_101 = arith.constant 0 : index
    %226 = vector.load %arg2[%225, %c0_101] : memref<64x128xf32, #tpu.memory_space<vmem>>, vector<1x128xf32>
    %227 = arith.addf %221, %226 : vector<1x128xf32>
    %c4_i32_102 = arith.constant 4 : i32
    %228 = arith.addi %0, %c4_i32_102 : i32
    %229 = arith.index_cast %228 : i32 to index
    %c5_103 = arith.constant 5 : index
    %230 = memref.load %arg1[%229, %c5_103] : memref<8x8xi32, #tpu.memory_space<smem>>
    %231 = arith.index_cast %230 : i32 to index
    %c0_104 = arith.constant 0 : index
    %232 = vector.load %arg2[%231, %c0_104] : memref<64x128xf32, #tpu.memory_space<vmem>>, vector<1x128xf32>
    %233 = arith.addf %227, %232 : vector<1x128xf32>
    %c4_i32_105 = arith.constant 4 : i32
    %234 = arith.addi %0, %c4_i32_105 : i32
    %235 = arith.index_cast %234 : i32 to index
    %c6_106 = arith.constant 6 : index
    %236 = memref.load %arg1[%235, %c6_106] : memref<8x8xi32, #tpu.memory_space<smem>>
    %237 = arith.index_cast %236 : i32 to index
    %c0_107 = arith.constant 0 : index
    %238 = vector.load %arg2[%237, %c0_107] : memref<64x128xf32, #tpu.memory_space<vmem>>, vector<1x128xf32>
    %239 = arith.addf %233, %238 : vector<1x128xf32>
    %c4_i32_108 = arith.constant 4 : i32
    %240 = arith.addi %0, %c4_i32_108 : i32
    %241 = arith.index_cast %240 : i32 to index
    %c7_109 = arith.constant 7 : index
    %242 = memref.load %arg1[%241, %c7_109] : memref<8x8xi32, #tpu.memory_space<smem>>
    %243 = arith.index_cast %242 : i32 to index
    %c0_110 = arith.constant 0 : index
    %244 = vector.load %arg2[%243, %c0_110] : memref<64x128xf32, #tpu.memory_space<vmem>>, vector<1x128xf32>
    %245 = arith.addf %239, %244 : vector<1x128xf32>
    %cst_111 = arith.constant 0.000000e+00 : f32
    %246 = vector.broadcast %cst_111 : f32 to vector<1x128xf32>
    %c5_i32 = arith.constant 5 : i32
    %247 = arith.addi %0, %c5_i32 : i32
    %248 = arith.index_cast %247 : i32 to index
    %c0_112 = arith.constant 0 : index
    %249 = memref.load %arg1[%248, %c0_112] : memref<8x8xi32, #tpu.memory_space<smem>>
    %250 = arith.index_cast %249 : i32 to index
    %c0_113 = arith.constant 0 : index
    %251 = vector.load %arg2[%250, %c0_113] : memref<64x128xf32, #tpu.memory_space<vmem>>, vector<1x128xf32>
    %252 = arith.addf %246, %251 : vector<1x128xf32>
    %c5_i32_114 = arith.constant 5 : i32
    %253 = arith.addi %0, %c5_i32_114 : i32
    %254 = arith.index_cast %253 : i32 to index
    %c1_115 = arith.constant 1 : index
    %255 = memref.load %arg1[%254, %c1_115] : memref<8x8xi32, #tpu.memory_space<smem>>
    %256 = arith.index_cast %255 : i32 to index
    %c0_116 = arith.constant 0 : index
    %257 = vector.load %arg2[%256, %c0_116] : memref<64x128xf32, #tpu.memory_space<vmem>>, vector<1x128xf32>
    %258 = arith.addf %252, %257 : vector<1x128xf32>
    %c5_i32_117 = arith.constant 5 : i32
    %259 = arith.addi %0, %c5_i32_117 : i32
    %260 = arith.index_cast %259 : i32 to index
    %c2_118 = arith.constant 2 : index
    %261 = memref.load %arg1[%260, %c2_118] : memref<8x8xi32, #tpu.memory_space<smem>>
    %262 = arith.index_cast %261 : i32 to index
    %c0_119 = arith.constant 0 : index
    %263 = vector.load %arg2[%262, %c0_119] : memref<64x128xf32, #tpu.memory_space<vmem>>, vector<1x128xf32>
    %264 = arith.addf %258, %263 : vector<1x128xf32>
    %c5_i32_120 = arith.constant 5 : i32
    %265 = arith.addi %0, %c5_i32_120 : i32
    %266 = arith.index_cast %265 : i32 to index
    %c3_121 = arith.constant 3 : index
    %267 = memref.load %arg1[%266, %c3_121] : memref<8x8xi32, #tpu.memory_space<smem>>
    %268 = arith.index_cast %267 : i32 to index
    %c0_122 = arith.constant 0 : index
    %269 = vector.load %arg2[%268, %c0_122] : memref<64x128xf32, #tpu.memory_space<vmem>>, vector<1x128xf32>
    %270 = arith.addf %264, %269 : vector<1x128xf32>
    %c5_i32_123 = arith.constant 5 : i32
    %271 = arith.addi %0, %c5_i32_123 : i32
    %272 = arith.index_cast %271 : i32 to index
    %c4_124 = arith.constant 4 : index
    %273 = memref.load %arg1[%272, %c4_124] : memref<8x8xi32, #tpu.memory_space<smem>>
    %274 = arith.index_cast %273 : i32 to index
    %c0_125 = arith.constant 0 : index
    %275 = vector.load %arg2[%274, %c0_125] : memref<64x128xf32, #tpu.memory_space<vmem>>, vector<1x128xf32>
    %276 = arith.addf %270, %275 : vector<1x128xf32>
    %c5_i32_126 = arith.constant 5 : i32
    %277 = arith.addi %0, %c5_i32_126 : i32
    %278 = arith.index_cast %277 : i32 to index
    %c5_127 = arith.constant 5 : index
    %279 = memref.load %arg1[%278, %c5_127] : memref<8x8xi32, #tpu.memory_space<smem>>
    %280 = arith.index_cast %279 : i32 to index
    %c0_128 = arith.constant 0 : index
    %281 = vector.load %arg2[%280, %c0_128] : memref<64x128xf32, #tpu.memory_space<vmem>>, vector<1x128xf32>
    %282 = arith.addf %276, %281 : vector<1x128xf32>
    %c5_i32_129 = arith.constant 5 : i32
    %283 = arith.addi %0, %c5_i32_129 : i32
    %284 = arith.index_cast %283 : i32 to index
    %c6_130 = arith.constant 6 : index
    %285 = memref.load %arg1[%284, %c6_130] : memref<8x8xi32, #tpu.memory_space<smem>>
    %286 = arith.index_cast %285 : i32 to index
    %c0_131 = arith.constant 0 : index
    %287 = vector.load %arg2[%286, %c0_131] : memref<64x128xf32, #tpu.memory_space<vmem>>, vector<1x128xf32>
    %288 = arith.addf %282, %287 : vector<1x128xf32>
    %c5_i32_132 = arith.constant 5 : i32
    %289 = arith.addi %0, %c5_i32_132 : i32
    %290 = arith.index_cast %289 : i32 to index
    %c7_133 = arith.constant 7 : index
    %291 = memref.load %arg1[%290, %c7_133] : memref<8x8xi32, #tpu.memory_space<smem>>
    %292 = arith.index_cast %291 : i32 to index
    %c0_134 = arith.constant 0 : index
    %293 = vector.load %arg2[%292, %c0_134] : memref<64x128xf32, #tpu.memory_space<vmem>>, vector<1x128xf32>
    %294 = arith.addf %288, %293 : vector<1x128xf32>
    %cst_135 = arith.constant 0.000000e+00 : f32
    %295 = vector.broadcast %cst_135 : f32 to vector<1x128xf32>
    %c6_i32 = arith.constant 6 : i32
    %296 = arith.addi %0, %c6_i32 : i32
    %297 = arith.index_cast %296 : i32 to index
    %c0_136 = arith.constant 0 : index
    %298 = memref.load %arg1[%297, %c0_136] : memref<8x8xi32, #tpu.memory_space<smem>>
    %299 = arith.index_cast %298 : i32 to index
    %c0_137 = arith.constant 0 : index
    %300 = vector.load %arg2[%299, %c0_137] : memref<64x128xf32, #tpu.memory_space<vmem>>, vector<1x128xf32>
    %301 = arith.addf %295, %300 : vector<1x128xf32>
    %c6_i32_138 = arith.constant 6 : i32
    %302 = arith.addi %0, %c6_i32_138 : i32
    %303 = arith.index_cast %302 : i32 to index
    %c1_139 = arith.constant 1 : index
    %304 = memref.load %arg1[%303, %c1_139] : memref<8x8xi32, #tpu.memory_space<smem>>
    %305 = arith.index_cast %304 : i32 to index
    %c0_140 = arith.constant 0 : index
    %306 = vector.load %arg2[%305, %c0_140] : memref<64x128xf32, #tpu.memory_space<vmem>>, vector<1x128xf32>
    %307 = arith.addf %301, %306 : vector<1x128xf32>
    %c6_i32_141 = arith.constant 6 : i32
    %308 = arith.addi %0, %c6_i32_141 : i32
    %309 = arith.index_cast %308 : i32 to index
    %c2_142 = arith.constant 2 : index
    %310 = memref.load %arg1[%309, %c2_142] : memref<8x8xi32, #tpu.memory_space<smem>>
    %311 = arith.index_cast %310 : i32 to index
    %c0_143 = arith.constant 0 : index
    %312 = vector.load %arg2[%311, %c0_143] : memref<64x128xf32, #tpu.memory_space<vmem>>, vector<1x128xf32>
    %313 = arith.addf %307, %312 : vector<1x128xf32>
    %c6_i32_144 = arith.constant 6 : i32
    %314 = arith.addi %0, %c6_i32_144 : i32
    %315 = arith.index_cast %314 : i32 to index
    %c3_145 = arith.constant 3 : index
    %316 = memref.load %arg1[%315, %c3_145] : memref<8x8xi32, #tpu.memory_space<smem>>
    %317 = arith.index_cast %316 : i32 to index
    %c0_146 = arith.constant 0 : index
    %318 = vector.load %arg2[%317, %c0_146] : memref<64x128xf32, #tpu.memory_space<vmem>>, vector<1x128xf32>
    %319 = arith.addf %313, %318 : vector<1x128xf32>
    %c6_i32_147 = arith.constant 6 : i32
    %320 = arith.addi %0, %c6_i32_147 : i32
    %321 = arith.index_cast %320 : i32 to index
    %c4_148 = arith.constant 4 : index
    %322 = memref.load %arg1[%321, %c4_148] : memref<8x8xi32, #tpu.memory_space<smem>>
    %323 = arith.index_cast %322 : i32 to index
    %c0_149 = arith.constant 0 : index
    %324 = vector.load %arg2[%323, %c0_149] : memref<64x128xf32, #tpu.memory_space<vmem>>, vector<1x128xf32>
    %325 = arith.addf %319, %324 : vector<1x128xf32>
    %c6_i32_150 = arith.constant 6 : i32
    %326 = arith.addi %0, %c6_i32_150 : i32
    %327 = arith.index_cast %326 : i32 to index
    %c5_151 = arith.constant 5 : index
    %328 = memref.load %arg1[%327, %c5_151] : memref<8x8xi32, #tpu.memory_space<smem>>
    %329 = arith.index_cast %328 : i32 to index
    %c0_152 = arith.constant 0 : index
    %330 = vector.load %arg2[%329, %c0_152] : memref<64x128xf32, #tpu.memory_space<vmem>>, vector<1x128xf32>
    %331 = arith.addf %325, %330 : vector<1x128xf32>
    %c6_i32_153 = arith.constant 6 : i32
    %332 = arith.addi %0, %c6_i32_153 : i32
    %333 = arith.index_cast %332 : i32 to index
    %c6_154 = arith.constant 6 : index
    %334 = memref.load %arg1[%333, %c6_154] : memref<8x8xi32, #tpu.memory_space<smem>>
    %335 = arith.index_cast %334 : i32 to index
    %c0_155 = arith.constant 0 : index
    %336 = vector.load %arg2[%335, %c0_155] : memref<64x128xf32, #tpu.memory_space<vmem>>, vector<1x128xf32>
    %337 = arith.addf %331, %336 : vector<1x128xf32>
    %c6_i32_156 = arith.constant 6 : i32
    %338 = arith.addi %0, %c6_i32_156 : i32
    %339 = arith.index_cast %338 : i32 to index
    %c7_157 = arith.constant 7 : index
    %340 = memref.load %arg1[%339, %c7_157] : memref<8x8xi32, #tpu.memory_space<smem>>
    %341 = arith.index_cast %340 : i32 to index
    %c0_158 = arith.constant 0 : index
    %342 = vector.load %arg2[%341, %c0_158] : memref<64x128xf32, #tpu.memory_space<vmem>>, vector<1x128xf32>
    %343 = arith.addf %337, %342 : vector<1x128xf32>
    %cst_159 = arith.constant 0.000000e+00 : f32
    %344 = vector.broadcast %cst_159 : f32 to vector<1x128xf32>
    %c7_i32 = arith.constant 7 : i32
    %345 = arith.addi %0, %c7_i32 : i32
    %346 = arith.index_cast %345 : i32 to index
    %c0_160 = arith.constant 0 : index
    %347 = memref.load %arg1[%346, %c0_160] : memref<8x8xi32, #tpu.memory_space<smem>>
    %348 = arith.index_cast %347 : i32 to index
    %c0_161 = arith.constant 0 : index
    %349 = vector.load %arg2[%348, %c0_161] : memref<64x128xf32, #tpu.memory_space<vmem>>, vector<1x128xf32>
    %350 = arith.addf %344, %349 : vector<1x128xf32>
    %c7_i32_162 = arith.constant 7 : i32
    %351 = arith.addi %0, %c7_i32_162 : i32
    %352 = arith.index_cast %351 : i32 to index
    %c1_163 = arith.constant 1 : index
    %353 = memref.load %arg1[%352, %c1_163] : memref<8x8xi32, #tpu.memory_space<smem>>
    %354 = arith.index_cast %353 : i32 to index
    %c0_164 = arith.constant 0 : index
    %355 = vector.load %arg2[%354, %c0_164] : memref<64x128xf32, #tpu.memory_space<vmem>>, vector<1x128xf32>
    %356 = arith.addf %350, %355 : vector<1x128xf32>
    %c7_i32_165 = arith.constant 7 : i32
    %357 = arith.addi %0, %c7_i32_165 : i32
    %358 = arith.index_cast %357 : i32 to index
    %c2_166 = arith.constant 2 : index
    %359 = memref.load %arg1[%358, %c2_166] : memref<8x8xi32, #tpu.memory_space<smem>>
    %360 = arith.index_cast %359 : i32 to index
    %c0_167 = arith.constant 0 : index
    %361 = vector.load %arg2[%360, %c0_167] : memref<64x128xf32, #tpu.memory_space<vmem>>, vector<1x128xf32>
    %362 = arith.addf %356, %361 : vector<1x128xf32>
    %c7_i32_168 = arith.constant 7 : i32
    %363 = arith.addi %0, %c7_i32_168 : i32
    %364 = arith.index_cast %363 : i32 to index
    %c3_169 = arith.constant 3 : index
    %365 = memref.load %arg1[%364, %c3_169] : memref<8x8xi32, #tpu.memory_space<smem>>
    %366 = arith.index_cast %365 : i32 to index
    %c0_170 = arith.constant 0 : index
    %367 = vector.load %arg2[%366, %c0_170] : memref<64x128xf32, #tpu.memory_space<vmem>>, vector<1x128xf32>
    %368 = arith.addf %362, %367 : vector<1x128xf32>
    %c7_i32_171 = arith.constant 7 : i32
    %369 = arith.addi %0, %c7_i32_171 : i32
    %370 = arith.index_cast %369 : i32 to index
    %c4_172 = arith.constant 4 : index
    %371 = memref.load %arg1[%370, %c4_172] : memref<8x8xi32, #tpu.memory_space<smem>>
    %372 = arith.index_cast %371 : i32 to index
    %c0_173 = arith.constant 0 : index
    %373 = vector.load %arg2[%372, %c0_173] : memref<64x128xf32, #tpu.memory_space<vmem>>, vector<1x128xf32>
    %374 = arith.addf %368, %373 : vector<1x128xf32>
    %c7_i32_174 = arith.constant 7 : i32
    %375 = arith.addi %0, %c7_i32_174 : i32
    %376 = arith.index_cast %375 : i32 to index
    %c5_175 = arith.constant 5 : index
    %377 = memref.load %arg1[%376, %c5_175] : memref<8x8xi32, #tpu.memory_space<smem>>
    %378 = arith.index_cast %377 : i32 to index
    %c0_176 = arith.constant 0 : index
    %379 = vector.load %arg2[%378, %c0_176] : memref<64x128xf32, #tpu.memory_space<vmem>>, vector<1x128xf32>
    %380 = arith.addf %374, %379 : vector<1x128xf32>
    %c7_i32_177 = arith.constant 7 : i32
    %381 = arith.addi %0, %c7_i32_177 : i32
    %382 = arith.index_cast %381 : i32 to index
    %c6_178 = arith.constant 6 : index
    %383 = memref.load %arg1[%382, %c6_178] : memref<8x8xi32, #tpu.memory_space<smem>>
    %384 = arith.index_cast %383 : i32 to index
    %c0_179 = arith.constant 0 : index
    %385 = vector.load %arg2[%384, %c0_179] : memref<64x128xf32, #tpu.memory_space<vmem>>, vector<1x128xf32>
    %386 = arith.addf %380, %385 : vector<1x128xf32>
    %c7_i32_180 = arith.constant 7 : i32
    %387 = arith.addi %0, %c7_i32_180 : i32
    %388 = arith.index_cast %387 : i32 to index
    %c7_181 = arith.constant 7 : index
    %389 = memref.load %arg1[%388, %c7_181] : memref<8x8xi32, #tpu.memory_space<smem>>
    %390 = arith.index_cast %389 : i32 to index
    %c0_182 = arith.constant 0 : index
    %391 = vector.load %arg2[%390, %c0_182] : memref<64x128xf32, #tpu.memory_space<vmem>>, vector<1x128xf32>
    %392 = arith.addf %386, %391 : vector<1x128xf32>
    %393 = tpu.concatenate %49, %98, %147, %196, %245, %294, %343, %392 in 0 : vector<1x128xf32>, vector<1x128xf32>, vector<1x128xf32>, vector<1x128xf32>, vector<1x128xf32>, vector<1x128xf32>, vector<1x128xf32>, vector<1x128xf32> -> vector<8x128xf32>
    %cst_183 = arith.constant 1.250000e-01 : f32
    %394 = vector.broadcast %cst_183 : f32 to vector<8x128xf32>
    %395 = arith.mulf %393, %394 : vector<8x128xf32>
    %c0_184 = arith.constant 0 : index
    %c0_185 = arith.constant 0 : index
    %396 = vector.load %arg3[%c0_184, %c0_185] : memref<8x128xf32, #tpu.memory_space<vmem>>, vector<8x128xf32>
    tpu.vector_store %arg3[%c0_184, %c0_185], %395 {strides = array<i32>} : memref<8x128xf32, #tpu.memory_space<vmem>>, vector<8x128xf32>,
    return
  }
  func.func @transform_0(%arg0: i32, %arg1: memref<8x8xi32, #tpu.memory_space<smem>>) -> (i32, i32) {
    %c0_i32 = arith.constant 0 : i32
    %c0_i32_0 = arith.constant 0 : i32
    %c0_i32_1 = arith.constant 0 : i32
    return %c0_i32, %c0_i32_0 : i32, i32
  }
  func.func @transform_1(%arg0: i32, %arg1: memref<8x8xi32, #tpu.memory_space<smem>>) -> (i32, i32) {
    %c0_i32 = arith.constant 0 : i32
    %c0_i32_0 = arith.constant 0 : i32
    return %arg0, %c0_i32 : i32, i32
  }
}

</mosaic_0001>

<llo_original>
// kernel: tpu_custom_call.1
$region0: #{tpu_custom_call.1}
  #allocation0 [shape = 'u32[]', space=smem, size = 0x4, offset = 0x4, fixed_abs, tag = 'smem constant byte address 0x4 - core index']
  #allocation1 [shape = 'u32[144,128]{1,0:T(1,128)}', space=vmem, size = 0x12000, scoped, tag = 'internal scratch']
  #allocation2 [shape = 's32[1]{0}', space=sflag, size = 0x4, scoped, tag = 'scoped memory for tpu_custom_call.1']
  #allocation3 [shape = 'u8[4096]{0}', space=smem, size = 0x1000, scoped, tag = 'prefetched SMEM operand 0']
  %s0 = inlined_call_operand.hbm [shape: s32[8,8], index: 0, kind: input, shape index: {}]
  %s1 = inlined_call_operand.hbm [shape: f32[64,128], index: 1, kind: input, shape index: {}]
  %s2 = inlined_call_operand.hbm [shape: f32[8,128], index: 2, kind: output, shape index: {}]
  %s3 = sld [smem:[#allocation0]]
  $region18: #{tpu_custom_call.1} parent=0
    _
  %s5 = ssub.s32 1, %s3
  %s6 = scalar_select 0, %s5, %s3
  %8 = dma.hbm_to_smem %s0, 128, [#allocation3], [#allocation2]
  %9 = dma.done [#allocation2], 128
  %10 = sfence
  $region1: #{tpu_custom_call.1} parent=0
    #allocation4 [shape = 'u8[32768]{0}', space=vmem, size = 0x8000, scoped, tag = 'input window, operand 1, single buffered']
    #allocation5 [shape = 's32[1]{0}', space=sflag, size = 0x4, scoped, tag = 'scoped memory for tpu_custom_call.1']
    #allocation6 [shape = 's32[1]{0}', space=sflag, size = 0x4, scoped, tag = 'scoped memory for tpu_custom_call.1']
    #allocation7 [shape = 'u8[4096]{0}', space=vmem, size = 0x1000, scoped, tag = 'output window, operand 0, single buffered']
    %11 = vsyncpa [#allocation5], 0
    %12 = vsyncpa [#allocation6], 0
    // Predicated region
    $region2: #{tpu_custom_call.1} parent=1 // pred_check
      _
    $region3: #{tpu_custom_call.1} parent=1 // pred_check_branch
      %14 = sbr.rel (0) target = $region5
    $region4: #{tpu_custom_call.1} parent=1 // pred_region
      %s16 = ssub.s32 1024, 1024
      %17 = vsyncadd [#allocation5], %s16
      %s18 = sshll.u32 [#allocation4], 4
      %s19 = int_to_ptr.vmem [resolvable:$true] %s18
      %24 = dma.hbm_to_vmem [thread:$0]  %s1, 1024, %s19, [#allocation5], 128, 128, 8
    $region5: #{tpu_custom_call.1} parent=1 // pred_fallthru
      _
    // Predicated region
    $region6: #{tpu_custom_call.1} parent=1 // pred_check
      _
    $region7: #{tpu_custom_call.1} parent=1 // pred_check_branch
      %26 = sbr.rel (0) target = $region9
    $region8: #{tpu_custom_call.1} parent=1 // pred_region
      %27 = dma.done [#allocation5], 1024
    $region9: #{tpu_custom_call.1} parent=1 // pred_fallthru
      _
    %s28 = smul.u32 0, 8
    %s29 = smul.u32 %s28, 128
    %s30 = sld [smem:[#allocation3 + %s29]]
    %s31 = scalar_lea.vmem [#allocation4], %s30
    %v32 = vld [vmem:[%s31] sm:$0x1]
    %v33 = vadd.f32 %v32, 0.0
    %s34 = sadd.s32 %s29, 1
    %s35 = sld [smem:[#allocation3 + %s34]]
    %s36 = scalar_lea.vmem [#allocation4], %s35
    %v37 = vld [vmem:[%s36] sm:$0x1]
    %v38 = vadd.f32 %v33, %v37
    %s39 = sadd.s32 %s29, 2
    %s40 = sld [smem:[#allocation3 + %s39]]
    %s41 = scalar_lea.vmem [#allocation4], %s40
    %v42 = vld [vmem:[%s41] sm:$0x1]
    %v43 = vadd.f32 %v38, %v42
    %s44 = sadd.s32 %s29, 3
    %s45 = sld [smem:[#allocation3 + %s44]]
    %s46 = scalar_lea.vmem [#allocation4], %s45
    %v47 = vld [vmem:[%s46] sm:$0x1]
    %v48 = vadd.f32 %v43, %v47
    %s49 = sadd.s32 %s29, 4
    %s50 = sld [smem:[#allocation3 + %s49]]
    %s51 = scalar_lea.vmem [#allocation4], %s50
    %v52 = vld [vmem:[%s51] sm:$0x1]
    %v53 = vadd.f32 %v48, %v52
    %s54 = sadd.s32 %s29, 5
    %s55 = sld [smem:[#allocation3 + %s54]]
    %s56 = scalar_lea.vmem [#allocation4], %s55
    %v57 = vld [vmem:[%s56] sm:$0x1]
    %v58 = vadd.f32 %v53, %v57
    %s59 = sadd.s32 %s29, 6
    %s60 = sld [smem:[#allocation3 + %s59]]
    %s61 = scalar_lea.vmem [#allocation4], %s60
    %v62 = vld [vmem:[%s61] sm:$0x1]
    %v63 = vadd.f32 %v58, %v62
    %s64 = sadd.s32 %s29, 7
    %s65 = sld [smem:[#allocation3 + %s64]]
    %s66 = scalar_lea.vmem [#allocation4], %s65
    %v67 = vld [vmem:[%s66] sm:$0x1]
    %v68 = vadd.f32 %v63, %v67
    %s69 = sadd.s32 %s28, 1
    %s70 = smul.u32 %s69, 128
    %s71 = sld [smem:[#allocation3 + %s70]]
    %s72 = scalar_lea.vmem [#allocation4], %s71
    %v73 = vld [vmem:[%s72] sm:$0x1]
    %v74 = vadd.f32 %v73, 0.0
    %s75 = sadd.s32 %s70, 1
    %s76 = sld [smem:[#allocation3 + %s75]]
    %s77 = scalar_lea.vmem [#allocation4], %s76
    %v78 = vld [vmem:[%s77] sm:$0x1]
    %v79 = vadd.f32 %v74, %v78
    %s80 = sadd.s32 %s70, 2
    %s81 = sld [smem:[#allocation3 + %s80]]
    %s82 = scalar_lea.vmem [#allocation4], %s81
    %v83 = vld [vmem:[%s82] sm:$0x1]
    %v84 = vadd.f32 %v79, %v83
    %s85 = sadd.s32 %s70, 3
    %s86 = sld [smem:[#allocation3 + %s85]]
    %s87 = scalar_lea.vmem [#allocation4], %s86
    %v88 = vld [vmem:[%s87] sm:$0x1]
    %v89 = vadd.f32 %v84, %v88
    %s90 = sadd.s32 %s70, 4
    %s91 = sld [smem:[#allocation3 + %s90]]
    %s92 = scalar_lea.vmem [#allocation4], %s91
    %v93 = vld [vmem:[%s92] sm:$0x1]
    %v94 = vadd.f32 %v89, %v93
    %s95 = sadd.s32 %s70, 5
    %s96 = sld [smem:[#allocation3 + %s95]]
    %s97 = scalar_lea.vmem [#allocation4], %s96
    %v98 = vld [vmem:[%s97] sm:$0x1]
    %v99 = vadd.f32 %v94, %v98
    %s100 = sadd.s32 %s70, 6
    %s101 = sld [smem:[#allocation3 + %s100]]
    %s102 = scalar_lea.vmem [#allocation4], %s101
    %v103 = vld [vmem:[%s102] sm:$0x1]
    %v104 = vadd.f32 %v99, %v103
    %s105 = sadd.s32 %s70, 7
    %s106 = sld [smem:[#allocation3 + %s105]]
    %s107 = scalar_lea.vmem [#allocation4], %s106
    %v108 = vld [vmem:[%s107] sm:$0x1]
    %v109 = vadd.f32 %v104, %v108
    %s110 = sadd.s32 %s28, 2
    %s111 = smul.u32 %s110, 128
    %s112 = sld [smem:[#allocation3 + %s111]]
    %s113 = scalar_lea.vmem [#allocation4], %s112
    %v114 = vld [vmem:[%s113] sm:$0x1]
    %v115 = vadd.f32 %v114, 0.0
    %s116 = sadd.s32 %s111, 1
    %s117 = sld [smem:[#allocation3 + %s116]]
    %s118 = scalar_lea.vmem [#allocation4], %s117
    %v119 = vld [vmem:[%s118] sm:$0x1]
    %v120 = vadd.f32 %v115, %v119
    %s121 = sadd.s32 %s111, 2
    %s122 = sld [smem:[#allocation3 + %s121]]
    %s123 = scalar_lea.vmem [#allocation4], %s122
    %v124 = vld [vmem:[%s123] sm:$0x1]
    %v125 = vadd.f32 %v120, %v124
    %s126 = sadd.s32 %s111, 3
    %s127 = sld [smem:[#allocation3 + %s126]]
    %s128 = scalar_lea.vmem [#allocation4], %s127
    %v129 = vld [vmem:[%s128] sm:$0x1]
    %v130 = vadd.f32 %v125, %v129
    %s131 = sadd.s32 %s111, 4
    %s132 = sld [smem:[#allocation3 + %s131]]
    %s133 = scalar_lea.vmem [#allocation4], %s132
    %v134 = vld [vmem:[%s133] sm:$0x1]
    %v135 = vadd.f32 %v130, %v134
    %s136 = sadd.s32 %s111, 5
    %s137 = sld [smem:[#allocation3 + %s136]]
    %s138 = scalar_lea.vmem [#allocation4], %s137
    %v139 = vld [vmem:[%s138] sm:$0x1]
    %v140 = vadd.f32 %v135, %v139
    %s141 = sadd.s32 %s111, 6
    %s142 = sld [smem:[#allocation3 + %s141]]
    %s143 = scalar_lea.vmem [#allocation4], %s142
    %v144 = vld [vmem:[%s143] sm:$0x1]
    %v145 = vadd.f32 %v140, %v144
    %s146 = sadd.s32 %s111, 7
    %s147 = sld [smem:[#allocation3 + %s146]]
    %s148 = scalar_lea.vmem [#allocation4], %s147
    %v149 = vld [vmem:[%s148] sm:$0x1]
    %v150 = vadd.f32 %v145, %v149
    %s151 = sadd.s32 %s28, 3
    %s152 = smul.u32 %s151, 128
    %s153 = sld [smem:[#allocation3 + %s152]]
    %s154 = scalar_lea.vmem [#allocation4], %s153
    %v155 = vld [vmem:[%s154] sm:$0x1]
    %v156 = vadd.f32 %v155, 0.0
    %s157 = sadd.s32 %s152, 1
    %s158 = sld [smem:[#allocation3 + %s157]]
    %s159 = scalar_lea.vmem [#allocation4], %s158
    %v160 = vld [vmem:[%s159] sm:$0x1]
    %v161 = vadd.f32 %v156, %v160
    %s162 = sadd.s32 %s152, 2
    %s163 = sld [smem:[#allocation3 + %s162]]
    %s164 = scalar_lea.vmem [#allocation4], %s163
    %v165 = vld [vmem:[%s164] sm:$0x1]
    %v166 = vadd.f32 %v161, %v165
    %s167 = sadd.s32 %s152, 3
    %s168 = sld [smem:[#allocation3 + %s167]]
    %s169 = scalar_lea.vmem [#allocation4], %s168
    %v170 = vld [vmem:[%s169] sm:$0x1]
    %v171 = vadd.f32 %v166, %v170
    %s172 = sadd.s32 %s152, 4
    %s173 = sld [smem:[#allocation3 + %s172]]
    %s174 = scalar_lea.vmem [#allocation4], %s173
    %v175 = vld [vmem:[%s174] sm:$0x1]
    %v176 = vadd.f32 %v171, %v175
    %s177 = sadd.s32 %s152, 5
    %s178 = sld [smem:[#allocation3 + %s177]]
    %s179 = scalar_lea.vmem [#allocation4], %s178
    %v180 = vld [vmem:[%s179] sm:$0x1]
    %v181 = vadd.f32 %v176, %v180
    %s182 = sadd.s32 %s152, 6
    %s183 = sld [smem:[#allocation3 + %s182]]
    %s184 = scalar_lea.vmem [#allocation4], %s183
    %v185 = vld [vmem:[%s184] sm:$0x1]
    %v186 = vadd.f32 %v181, %v185
    %s187 = sadd.s32 %s152, 7
    %s188 = sld [smem:[#allocation3 + %s187]]
    %s189 = scalar_lea.vmem [#allocation4], %s188
    %v190 = vld [vmem:[%s189] sm:$0x1]
    %v191 = vadd.f32 %v186, %v190
    %s192 = sadd.s32 %s28, 4
    %s193 = smul.u32 %s192, 128
    %s194 = sld [smem:[#allocation3 + %s193]]
    %s195 = scalar_lea.vmem [#allocation4], %s194
    %v196 = vld [vmem:[%s195] sm:$0x1]
    %v197 = vadd.f32 %v196, 0.0
    %s198 = sadd.s32 %s193, 1
    %s199 = sld [smem:[#allocation3 + %s198]]
    %s200 = scalar_lea.vmem [#allocation4], %s199
    %v201 = vld [vmem:[%s200] sm:$0x1]
    %v202 = vadd.f32 %v197, %v201
    %s203 = sadd.s32 %s193, 2
    %s204 = sld [smem:[#allocation3 + %s203]]
    %s205 = scalar_lea.vmem [#allocation4], %s204
    %v206 = vld [vmem:[%s205] sm:$0x1]
    %v207 = vadd.f32 %v202, %v206
    %s208 = sadd.s32 %s193, 3
    %s209 = sld [smem:[#allocation3 + %s208]]
    %s210 = scalar_lea.vmem [#allocation4], %s209
    %v211 = vld [vmem:[%s210] sm:$0x1]
    %v212 = vadd.f32 %v207, %v211
    %s213 = sadd.s32 %s193, 4
    %s214 = sld [smem:[#allocation3 + %s213]]
    %s215 = scalar_lea.vmem [#allocation4], %s214
    %v216 = vld [vmem:[%s215] sm:$0x1]
    %v217 = vadd.f32 %v212, %v216
    %s218 = sadd.s32 %s193, 5
    %s219 = sld [smem:[#allocation3 + %s218]]
    %s220 = scalar_lea.vmem [#allocation4], %s219
    %v221 = vld [vmem:[%s220] sm:$0x1]
    %v222 = vadd.f32 %v217, %v221
    %s223 = sadd.s32 %s193, 6
    %s224 = sld [smem:[#allocation3 + %s223]]
    %s225 = scalar_lea.vmem [#allocation4], %s224
    %v226 = vld [vmem:[%s225] sm:$0x1]
    %v227 = vadd.f32 %v222, %v226
    %s228 = sadd.s32 %s193, 7
    %s229 = sld [smem:[#allocation3 + %s228]]
    %s230 = scalar_lea.vmem [#allocation4], %s229
    %v231 = vld [vmem:[%s230] sm:$0x1]
    %v232 = vadd.f32 %v227, %v231
    %s233 = sadd.s32 %s28, 5
    %s234 = smul.u32 %s233, 128
    %s235 = sld [smem:[#allocation3 + %s234]]
    %s236 = scalar_lea.vmem [#allocation4], %s235
    %v237 = vld [vmem:[%s236] sm:$0x1]
    %v238 = vadd.f32 %v237, 0.0
    %s239 = sadd.s32 %s234, 1
    %s240 = sld [smem:[#allocation3 + %s239]]
    %s241 = scalar_lea.vmem [#allocation4], %s240
    %v242 = vld [vmem:[%s241] sm:$0x1]
    %v243 = vadd.f32 %v238, %v242
    %s244 = sadd.s32 %s234, 2
    %s245 = sld [smem:[#allocation3 + %s244]]
    %s246 = scalar_lea.vmem [#allocation4], %s245
    %v247 = vld [vmem:[%s246] sm:$0x1]
    %v248 = vadd.f32 %v243, %v247
    %s249 = sadd.s32 %s234, 3
    %s250 = sld [smem:[#allocation3 + %s249]]
    %s251 = scalar_lea.vmem [#allocation4], %s250
    %v252 = vld [vmem:[%s251] sm:$0x1]
    %v253 = vadd.f32 %v248, %v252
    %s254 = sadd.s32 %s234, 4
    %s255 = sld [smem:[#allocation3 + %s254]]
    %s256 = scalar_lea.vmem [#allocation4], %s255
    %v257 = vld [vmem:[%s256] sm:$0x1]
    %v258 = vadd.f32 %v253, %v257
    %s259 = sadd.s32 %s234, 5
    %s260 = sld [smem:[#allocation3 + %s259]]
    %s261 = scalar_lea.vmem [#allocation4], %s260
    %v262 = vld [vmem:[%s261] sm:$0x1]
    %v263 = vadd.f32 %v258, %v262
    %s264 = sadd.s32 %s234, 6
    %s265 = sld [smem:[#allocation3 + %s264]]
    %s266 = scalar_lea.vmem [#allocation4], %s265
    %v267 = vld [vmem:[%s266] sm:$0x1]
    %v268 = vadd.f32 %v263, %v267
    %s269 = sadd.s32 %s234, 7
    %s270 = sld [smem:[#allocation3 + %s269]]
    %s271 = scalar_lea.vmem [#allocation4], %s270
    %v272 = vld [vmem:[%s271] sm:$0x1]
    %v273 = vadd.f32 %v268, %v272
    %s274 = sadd.s32 %s28, 6
    %s275 = smul.u32 %s274, 128
    %s276 = sld [smem:[#allocation3 + %s275]]
    %s277 = scalar_lea.vmem [#allocation4], %s276
    %v278 = vld [vmem:[%s277] sm:$0x1]
    %v279 = vadd.f32 %v278, 0.0
    %s280 = sadd.s32 %s275, 1
    %s281 = sld [smem:[#allocation3 + %s280]]
    %s282 = scalar_lea.vmem [#allocation4], %s281
    %v283 = vld [vmem:[%s282] sm:$0x1]
    %v284 = vadd.f32 %v279, %v283
    %s285 = sadd.s32 %s275, 2
    %s286 = sld [smem:[#allocation3 + %s285]]
    %s287 = scalar_lea.vmem [#allocation4], %s286
    %v288 = vld [vmem:[%s287] sm:$0x1]
    %v289 = vadd.f32 %v284, %v288
    %s290 = sadd.s32 %s275, 3
    %s291 = sld [smem:[#allocation3 + %s290]]
    %s292 = scalar_lea.vmem [#allocation4], %s291
    %v293 = vld [vmem:[%s292] sm:$0x1]
    %v294 = vadd.f32 %v289, %v293
    %s295 = sadd.s32 %s275, 4
    %s296 = sld [smem:[#allocation3 + %s295]]
    %s297 = scalar_lea.vmem [#allocation4], %s296
    %v298 = vld [vmem:[%s297] sm:$0x1]
    %v299 = vadd.f32 %v294, %v298
    %s300 = sadd.s32 %s275, 5
    %s301 = sld [smem:[#allocation3 + %s300]]
    %s302 = scalar_lea.vmem [#allocation4], %s301
    %v303 = vld [vmem:[%s302] sm:$0x1]
    %v304 = vadd.f32 %v299, %v303
    %s305 = sadd.s32 %s275, 6
    %s306 = sld [smem:[#allocation3 + %s305]]
    %s307 = scalar_lea.vmem [#allocation4], %s306
    %v308 = vld [vmem:[%s307] sm:$0x1]
    %v309 = vadd.f32 %v304, %v308
    %s310 = sadd.s32 %s275, 7
    %s311 = sld [smem:[#allocation3 + %s310]]
    %s312 = scalar_lea.vmem [#allocation4], %s311
    %v313 = vld [vmem:[%s312] sm:$0x1]
    %v314 = vadd.f32 %v309, %v313
    %s315 = sadd.s32 %s28, 7
    %s316 = smul.u32 %s315, 128
    %s317 = sld [smem:[#allocation3 + %s316]]
    %s318 = scalar_lea.vmem [#allocation4], %s317
    %v319 = vld [vmem:[%s318] sm:$0x1]
    %v320 = vadd.f32 %v319, 0.0
    %s321 = sadd.s32 %s316, 1
    %s322 = sld [smem:[#allocation3 + %s321]]
    %s323 = scalar_lea.vmem [#allocation4], %s322
    %v324 = vld [vmem:[%s323] sm:$0x1]
    %v325 = vadd.f32 %v320, %v324
    %s326 = sadd.s32 %s316, 2
    %s327 = sld [smem:[#allocation3 + %s326]]
    %s328 = scalar_lea.vmem [#allocation4], %s327
    %v329 = vld [vmem:[%s328] sm:$0x1]
    %v330 = vadd.f32 %v325, %v329
    %s331 = sadd.s32 %s316, 3
    %s332 = sld [smem:[#allocation3 + %s331]]
    %s333 = scalar_lea.vmem [#allocation4], %s332
    %v334 = vld [vmem:[%s333] sm:$0x1]
    %v335 = vadd.f32 %v330, %v334
    %s336 = sadd.s32 %s316, 4
    %s337 = sld [smem:[#allocation3 + %s336]]
    %s338 = scalar_lea.vmem [#allocation4], %s337
    %v339 = vld [vmem:[%s338] sm:$0x1]
    %v340 = vadd.f32 %v335, %v339
    %s341 = sadd.s32 %s316, 5
    %s342 = sld [smem:[#allocation3 + %s341]]
    %s343 = scalar_lea.vmem [#allocation4], %s342
    %v344 = vld [vmem:[%s343] sm:$0x1]
    %v345 = vadd.f32 %v340, %v344
    %s346 = sadd.s32 %s316, 6
    %s347 = sld [smem:[#allocation3 + %s346]]
    %s348 = scalar_lea.vmem [#allocation4], %s347
    %v349 = vld [vmem:[%s348] sm:$0x1]
    %v350 = vadd.f32 %v345, %v349
    %s351 = sadd.s32 %s316, 7
    %s352 = sld [smem:[#allocation3 + %s351]]
    %s353 = scalar_lea.vmem [#allocation4], %s352
    %v354 = vld [vmem:[%s353] sm:$0x1]
    %v355 = vadd.f32 %v350, %v354
    %v357 = vrot.slane %v109, 7
    %v360 = vrot.slane %v150, 6
    %v363 = vrot.slane %v191, 5
    %v366 = vrot.slane %v232, 4
    %v369 = vrot.slane %v273, 3
    %v372 = vrot.slane %v314, 2
    %v375 = vrot.slane %v355, 1
    %vm377 = vcmask 1040384
    %v378 = vsel %vm377, %v68, %v357
    %vm379 = vcmask 1041408
    %v380 = vsel %vm379, %v378, %v360
    %vm381 = vcmask 1042432
    %v382 = vsel %vm381, %v380, %v363
    %vm383 = vcmask 1043456
    %v384 = vsel %vm383, %v382, %v366
    %vm385 = vcmask 1044480
    %v386 = vsel %vm385, %v384, %v369
    %vm387 = vcmask 1045504
    %v388 = vsel %vm387, %v386, %v372
    %vm389 = vcmask 1046528
    %v390 = vsel %vm389, %v388, %v375
    %v391 = vmul.f32 %v390, 0.125
    %392 = vst [vmem:[#allocation7] sm:$0xff] %v391
    // Predicated region
    $region10: #{tpu_custom_call.1} parent=1 // pred_check
      _
    $region11: #{tpu_custom_call.1} parent=1 // pred_check_branch
      %394 = sbr.rel (0) target = $region13
    $region12: #{tpu_custom_call.1} parent=1 // pred_region
      %s396 = ssub.s32 128, 128
      %397 = vsyncadd [#allocation6], %s396
      %s399 = sshll.u32 [#allocation7], 4
      %s400 = int_to_ptr.vmem [resolvable:$true] %s399
      %402 = dma.vmem_to_hbm [thread:$0]  %s400, 128, %s2, [#allocation6]
    $region13: #{tpu_custom_call.1} parent=1 // pred_fallthru
      _
    // Predicated region
    $region14: #{tpu_custom_call.1} parent=1 // pred_check
      _
    $region15: #{tpu_custom_call.1} parent=1 // pred_check_branch
      %404 = sbr.rel (0) target = $region17
    $region16: #{tpu_custom_call.1} parent=1 // pred_region
      %405 = dma.done [#allocation6], 128
    $region17: #{tpu_custom_call.1} parent=1 // pred_fallthru
      _
    %406 = vsyncpa [#allocation5], 1
    %407 = vsyncpa [#allocation6], 1

</llo_original>
